<compile_context>
chip_gen: v7x
topology: tpu7x:2x2x1
jax: 0.10.0
libtpu: 0.0.40
codegen_flags: <defaults>
</compile_context>

<pallas_src>
import jax
import jax.numpy as jnp
from jax.experimental import pallas as pl
from jax.experimental.pallas import tpu as pltpu

# ~8 MiB of input HBM traffic per grid step: big enough to reach the HBM
# roofline on v7x (3.2 TB/s, ~0.35us/step overhead) while the double-buffered
# working set stays well inside 64 MiB VMEM; also comfortably fine on the
# 128 MiB v5e/v6e parts.
_TARGET_STEP_BYTES = 8 * 1024 * 1024
_VMEM_CAP = 56 << 20  # keep the scoped limit under v7x's 64 MiB physical VMEM


def _round_down(x, m):
    return (x // m) * m


def _round_up(x, m):
    return -(-x // m) * m


def _dot_score_repacked_kernel(x_ref, qb_ref, o_ref):
    # x_ref:  (TR, 128) tile of the repacked input (G original rows per row)
    # qb_ref: (128, G)  block-structured query (constant index_map -> resident)
    # o_ref:  (TR, G)   o[r, g] = score of original flattened row r*G + g
    o_ref[...] = jnp.dot(x_ref[...], qb_ref[...],
                         preferred_element_type=jnp.float32).astype(o_ref.dtype)


def _dot_score_kernel(x_ref, q_ref, o_ref):
    # Generic path: x_ref (TR, H) tile, q_ref (H, 1) resident, o_ref (1, TR).
    s = jnp.dot(x_ref[...], q_ref[...], preferred_element_type=jnp.float32)
    # Thin (TR,1)->(1,TR) transpose keeps the HBM writeback lane-dense; its
    # XLU cost (TR elements) hides under the (TR*H)-element input stream.
    o_ref[...] = s.T.astype(o_ref.dtype)


def _score_repacked(x3d, q, B, S, H, M):
    """H < 128, 128 % H == 0, M % (128//H) == 0: 128-lane-dense repack path."""
    G = 128 // H
    Mr = M // G
    itemsize = jnp.dtype(x3d.dtype).itemsize

    # Free, contiguous reshape: repacked row r holds original rows r*G..r*G+G-1.
    x = x3d.reshape(Mr, 128)
    # Block-structured query: qb[g*H + h, g] = q[h]; zeros elsewhere.
    qb = jnp.kron(jnp.eye(G, dtype=x3d.dtype), q.astype(x3d.dtype))  # (128, G)

    rows_target = max(8, _round_down(_TARGET_STEP_BYTES // (128 * itemsize), 8))
    if Mr <= rows_target:
        TR, num_tiles = Mr, 1                 # one full-array block (always legal)
    else:
        TR = rows_target                      # multiple of 8 sublanes
        num_tiles = pl.cdiv(Mr, TR)           # partial last block, no jnp.pad

    # VMEM accounting WITH layout padding: the (TR, G) out block lane-pads
    # G -> 128; the (128, G) query pads likewise; inputs are already 128-wide.
    in_buf = TR * 128 * itemsize
    out_buf = max(TR, 8) * 128 * 4
    q_buf = 128 * 128 * itemsize
    needed = 2 * in_buf + 2 * out_buf + 2 * q_buf
    vmem_limit = int(min(max(needed + (4 << 20), 16 << 20), _VMEM_CAP))

    out = pl.pallas_call(
        _dot_score_repacked_kernel,
        out_shape=jax.ShapeDtypeStruct((num_tiles * TR, G), jnp.float32),
        grid_spec=pltpu.PrefetchScalarGridSpec(
            num_scalar_prefetch=0,
            grid=(num_tiles,),
            in_specs=[
                pl.BlockSpec((TR, 128), lambda i: (i, 0)),  # streamed row tiles
                pl.BlockSpec((128, G), lambda i: (0, 0)),   # resident query
            ],
            out_specs=pl.BlockSpec((TR, G), lambda i: (i, 0)),
        ),
        compiler_params=pltpu.CompilerParams(
            dimension_semantics=("parallel",),  # shards row tiles across TCs
            vmem_limit_bytes=vmem_limit,
        ),
        cost_estimate=pl.CostEstimate(
            flops=2 * M * H, transcendentals=0,
            bytes_accessed=M * H * itemsize + M * 4 + 128 * G * itemsize),
    )(x, qb)

    # Row-major flatten of (rows, G) restores the original row order; garbage
    # from a partial last input block (if any) is discarded by [:M].
    return out.reshape(num_tiles * TR * G)[:M].reshape(B, S)


def _score_general(x3d, q, B, S, H, M):
    """Generic path (H >= 128 or awkward H): stream (TR, H) row tiles."""
    itemsize = jnp.dtype(x3d.dtype).itemsize
    x = x3d.reshape(M, H)

    lane_h = _round_up(H, 128)             # lane-padded width in VMEM
    rows_target = max(
        128, _round_down(_TARGET_STEP_BYTES // (lane_h * itemsize), 128))
    if M <= rows_target:
        TR, num_tiles = M, 1
    else:
        TR = rows_target                   # multiple of 128 (lane-dense out)
        num_tiles = pl.cdiv(M, TR)         # partial last block, no jnp.pad

    in_buf = TR * lane_h * itemsize
    out_buf = 8 * _round_up(TR, 128) * 4   # (1, TR) block: 8 sublanes x TR lanes
    q_buf = _round_up(H, 8) * 128 * itemsize
    needed = 2 * in_buf + 2 * out_buf + 2 * q_buf
    vmem_limit = int(min(max(needed + (4 << 20), 16 << 20), _VMEM_CAP))

    out = pl.pallas_call(
        _dot_score_kernel,
        out_shape=jax.ShapeDtypeStruct((num_tiles, TR), jnp.float32),
        grid_spec=pltpu.PrefetchScalarGridSpec(
            num_scalar_prefetch=0,
            grid=(num_tiles,),
            in_specs=[
                pl.BlockSpec((TR, H), lambda i: (i, 0)),   # streamed row tiles
                pl.BlockSpec((H, 1), lambda i: (0, 0)),    # resident query
            ],
            out_specs=pl.BlockSpec((1, TR), lambda i: (i, 0)),  # lane-dense out
        ),
        compiler_params=pltpu.CompilerParams(
            dimension_semantics=("parallel",),
            vmem_limit_bytes=vmem_limit,
        ),
        cost_estimate=pl.CostEstimate(
            flops=2 * M * H, transcendentals=0,
            bytes_accessed=M * H * itemsize + M * 4 + H * itemsize),
    )(x, q)

    return out.reshape(num_tiles * TR)[:M].reshape(B, S)


def dot_product_score(inputs, q):
    """inputs: [B, S, H], q: [H, 1]  ->  scores: [B, S] float32."""
    B, S, H = inputs.shape
    M = B * S
    q = q.reshape(H, 1)
    if H < 128 and 128 % H == 0 and M % (128 // H) == 0:
        return _score_repacked(inputs, q, B, S, H, M)
    return _score_general(inputs, q, B, S, H, M)


if __name__ == "__main__":
    batch_size, seq_len, hidden_size = 2, 8, 32

    key = jax.random.PRNGKey(0)
    k_x, k_q = jax.random.split(key)

    # Deterministic inputs and parameter (q ~ uniform(-0.5, 0.5), as in __init__).
    inputs = jax.random.normal(k_x, (batch_size, seq_len, hidden_size),
                               dtype=jnp.float32)
    q = jax.random.uniform(k_q, (hidden_size, 1), dtype=jnp.float32,
                           minval=-0.5, maxval=0.5)

    scores = dot_product_score(inputs, q)
    scores = jax.block_until_ready(scores)

    # Reference check in plain JAX.
    ref = jnp.squeeze(jnp.matmul(inputs, q), axis=-1)
    assert scores.shape == (batch_size, seq_len)
    assert jnp.allclose(scores, ref, atol=1e-5, rtol=1e-5)

    print("KERNEL_OK")
</pallas_src>

<mosaic_0001>
module attributes {stable_mosaic.version = 11 : i64} {
  func.func @_dot_score_repacked_kernel(%arg0: i32, %arg1: memref<4x128xf32, #tpu.memory_space<vmem>>, %arg2: memref<128x4xf32, #tpu.memory_space<vmem>>, %arg3: memref<4x4xf32, #tpu.memory_space<vmem>>) attributes {dimension_semantics = [#tpu.dimension_semantics<parallel>], iteration_bounds = array<i64: 1>, scalar_prefetch = 0 : i64, scratch_operands = 0 : i64, tpu.core_type = #tpu.core_type<tc>, window_params = [{transform_indices = @transform_0, window_bounds = array<i64: 4, 128>}, {pipeline_mode = #tpu.pipeline_mode<synchronous>, transform_indices = @transform_1, window_bounds = array<i64: 128, 4>}, {transform_indices = @transform_2, window_bounds = array<i64: 4, 4>}]} {
    %c0 = arith.constant 0 : index
    %c0_0 = arith.constant 0 : index
    %0 = vector.load %arg1[%c0, %c0_0] : memref<4x128xf32, #tpu.memory_space<vmem>>, vector<4x128xf32>
    %c0_1 = arith.constant 0 : index
    %c0_2 = arith.constant 0 : index
    %1 = vector.load %arg2[%c0_1, %c0_2] : memref<128x4xf32, #tpu.memory_space<vmem>>, vector<128x4xf32>
    %cst = arith.constant dense<0.000000e+00> : vector<4x4xf32>
    %2 = tpu.matmul %0, %1, %cst {dimension_numbers = #tpu.dot_dimension_numbers<[1], [0], [0], [1], [0, 0, 1, 1], [], []>} : vector<4x128xf32>, vector<128x4xf32>, vector<4x4xf32> -> vector<4x4xf32>
    %c0_3 = arith.constant 0 : index
    %c0_4 = arith.constant 0 : index
    %3 = vector.load %arg3[%c0_3, %c0_4] : memref<4x4xf32, #tpu.memory_space<vmem>>, vector<4x4xf32>
    tpu.vector_store %arg3[%c0_3, %c0_4], %2 {strides = array<i32>} : memref<4x4xf32, #tpu.memory_space<vmem>>, vector<4x4xf32>,
    return
  }
  func.func @transform_0(%arg0: i32) -> (i32, i32) {
    %c0_i32 = arith.constant 0 : i32
    %c0_i32_0 = arith.constant 0 : i32
    return %arg0, %c0_i32 : i32, i32
  }
  func.func @transform_1(%arg0: i32) -> (i32, i32) {
    %c0_i32 = arith.constant 0 : i32
    %c0_i32_0 = arith.constant 0 : i32
    %c0_i32_1 = arith.constant 0 : i32
    return %c0_i32, %c0_i32_0 : i32, i32
  }
  func.func @transform_2(%arg0: i32) -> (i32, i32) {
    %c0_i32 = arith.constant 0 : i32
    %c0_i32_0 = arith.constant 0 : i32
    return %arg0, %c0_i32 : i32, i32
  }
}

</mosaic_0001>

<llo_original>
// kernel: tpu_custom_call.1
$region0: #{tpu_custom_call.1}
  #allocation0 [shape = 'u32[]', space=smem, size = 0x4, offset = 0x4, fixed_abs, tag = 'smem constant byte address 0x4 - core index']
  #allocation1 [shape = 'u32[144,128]{1,0:T(1,128)}', space=vmem, size = 0x12000, scoped, tag = 'internal scratch']
  %s0 = inlined_call_operand.vmem [shape: f32[4,128], index: 0, kind: input, shape index: {}]
  %s1 = inlined_call_operand.vmem [shape: f32[128,4], index: 1, kind: input, shape index: {}]
  %s2 = inlined_call_operand.hbm [shape: f32[4,4], index: 2, kind: output, shape index: {}]
  %s3 = sld [smem:[#allocation0]]
  $region18: #{tpu_custom_call.1} parent=0
    _
  %s5 = ssub.s32 1, %s3
  %s6 = scalar_select 0, %s5, %s3
  $region1: #{tpu_custom_call.1} parent=0
    #allocation2 [shape = 'u8[2048]{0}', space=vmem, size = 0x800, scoped, tag = 'output window, operand 0, single buffered']
    #allocation3 [shape = 's32[1]{0}', space=sflag, size = 0x4, scoped, tag = 'scoped memory for tpu_custom_call.1']
    %7 = vsyncpa [#allocation3], 0
    // Predicated region
    $region2: #{tpu_custom_call.1} parent=1 // pred_check
      _
    $region3: #{tpu_custom_call.1} parent=1 // pred_check_branch
      %9 = sbr.rel (0) target = $region5
    $region4: #{tpu_custom_call.1} parent=1 // pred_region
      _
    $region5: #{tpu_custom_call.1} parent=1 // pred_fallthru
      _
    // Predicated region
    $region6: #{tpu_custom_call.1} parent=1 // pred_check
      _
    $region7: #{tpu_custom_call.1} parent=1 // pred_check_branch
      %11 = sbr.rel (0) target = $region9
    $region8: #{tpu_custom_call.1} parent=1 // pred_region
      _
    $region9: #{tpu_custom_call.1} parent=1 // pred_fallthru
      _
    %v12 = vld [vmem:[%s0] sm:$0xf]
    %v13 = vld [vmem:[%s1] sm:$0xff]
    %v14 = vld [vmem:[%s1 + $0x8] sm:$0xff]
    %v15 = vld [vmem:[%s1 + $0x10] sm:$0xff]
    %v16 = vld [vmem:[%s1 + $0x18] sm:$0xff]
    %v17 = vld [vmem:[%s1 + $0x20] sm:$0xff]
    %v18 = vld [vmem:[%s1 + $0x28] sm:$0xff]
    %v19 = vld [vmem:[%s1 + $0x30] sm:$0xff]
    %v20 = vld [vmem:[%s1 + $0x38] sm:$0xff]
    %v21 = vld [vmem:[%s1 + $0x40] sm:$0xff]
    %v22 = vld [vmem:[%s1 + $0x48] sm:$0xff]
    %v23 = vld [vmem:[%s1 + $0x50] sm:$0xff]
    %v24 = vld [vmem:[%s1 + $0x58] sm:$0xff]
    %v25 = vld [vmem:[%s1 + $0x60] sm:$0xff]
    %v26 = vld [vmem:[%s1 + $0x68] sm:$0xff]
    %v27 = vld [vmem:[%s1 + $0x70] sm:$0xff]
    %v28 = vld [vmem:[%s1 + $0x78] sm:$0xff]
    %29 = vmatprep.subr.mxu0 0.0
    %30 = vmatpush1.msra.mxu0 %v13
    %31 = vmatprep.subr.mxu0 0.0
    %32 = vmatpush1.msra.mxu0 %v14
    %33 = vmatprep.subr.mxu0 0.0
    %34 = vmatpush1.msra.mxu0 %v15
    %35 = vmatprep.subr.mxu0 0.0
    %36 = vmatpush1.msra.mxu0 %v16
    %37 = vmatprep.subr.mxu0 0.0
    %38 = vmatpush1.msra.mxu0 %v17
    %39 = vmatprep.subr.mxu0 0.0
    %40 = vmatpush1.msra.mxu0 %v18
    %41 = vmatprep.subr.mxu0 0.0
    %42 = vmatpush1.msra.mxu0 %v19
    %43 = vmatprep.subr.mxu0 0.0
    %44 = vmatpush1.msra.mxu0 %v20
    %45 = vmatprep.subr.mxu0 0.0
    %46 = vmatpush1.msra.mxu0 %v21
    %47 = vmatprep.subr.mxu0 0.0
    %48 = vmatpush1.msra.mxu0 %v22
    %49 = vmatprep.subr.mxu0 0.0
    %50 = vmatpush1.msra.mxu0 %v23
    %51 = vmatprep.subr.mxu0 0.0
    %52 = vmatpush1.msra.mxu0 %v24
    %53 = vmatprep.subr.mxu0 0.0
    %54 = vmatpush1.msra.mxu0 %v25
    %55 = vmatprep.subr.mxu0 0.0
    %56 = vmatpush1.msra.mxu0 %v26
    %57 = vmatprep.subr.mxu0 0.0
    %58 = vmatpush1.msra.mxu0 %v27
    %59 = vmatprep.subr.mxu0 0.0
    %60 = vmatpush1.msra.mxu0 %v28
    %61 = vmatprep.subr.mxu0 0.0
    %62 = vmatpush1.msra.mxu0 0.0
    %63 = vmatprep.subr.mxu0 0.0
    %64 = vmatpush1.msra.mxu0 0.0
    %65 = vmatprep.subr.mxu0 0.0
    %66 = vmatpush1.msra.mxu0 0.0
    %67 = vmatprep.subr.mxu0 0.0
    %68 = vmatpush1.msra.mxu0 0.0
    %69 = vmatprep.subr.mxu0 0.0
    %70 = vmatpush1.msra.mxu0 0.0
    %71 = vmatprep.subr.mxu0 0.0
    %72 = vmatpush1.msra.mxu0 0.0
    %73 = vmatprep.subr.mxu0 0.0
    %74 = vmatpush1.msra.mxu0 0.0
    %75 = vmatprep.subr.mxu0 0.0
    %76 = vmatpush1.msra.mxu0 0.0
    %77 = vmatprep.subr.mxu0 0.0
    %78 = vmatpush1.msra.mxu0 0.0
    %79 = vmatprep.subr.mxu0 0.0
    %80 = vmatpush1.msra.mxu0 0.0
    %81 = vmatprep.subr.mxu0 0.0
    %82 = vmatpush1.msra.mxu0 0.0
    %83 = vmatprep.subr.mxu0 0.0
    %84 = vmatpush1.msra.mxu0 0.0
    %85 = vmatprep.subr.mxu0 0.0
    %86 = vmatpush1.msra.mxu0 0.0
    %87 = vmatprep.subr.mxu0 0.0
    %88 = vmatpush1.msra.mxu0 0.0
    %89 = vmatprep.subr.mxu0 0.0
    %90 = vmatpush1.msra.mxu0 0.0
    %91 = vmatprep.subr.mxu0 0.0
    %92 = vmatpush1.msra.mxu0 0.0
    %93 = vmatprep.mubr.f32.mxu0 0.0
    %94 = vmatmul.mubr.f32.gmra.mrb[0].mxu0 %v12
    %v95 = vpop.f32.mrb[0].mxu0
    %v96 = vadd.f32 0.0, %v95
    %v97 = vpop.f32.mrb[0].mxu0
    %98 = vdwg.mxu0
    %vm99 = vcmask 27648
    %100 = vst.msk [vmem:[#allocation2] sm:$0xf] %vm99, %v96
    // Predicated region
    $region10: #{tpu_custom_call.1} parent=1 // pred_check
      _
    $region11: #{tpu_custom_call.1} parent=1 // pred_check_branch
      %102 = sbr.rel (0) target = $region13
    $region12: #{tpu_custom_call.1} parent=1 // pred_region
      %s104 = ssub.s32 64, 64
      %105 = vsyncadd [#allocation3], %s104
      %s107 = sshll.u32 [#allocation2], 4
      %s108 = int_to_ptr.vmem [resolvable:$true] %s107
      %110 = dma.vmem_to_hbm [thread:$0]  %s108, 64, %s2, [#allocation3]
    $region13: #{tpu_custom_call.1} parent=1 // pred_fallthru
      _
    // Predicated region
    $region14: #{tpu_custom_call.1} parent=1 // pred_check
      _
    $region15: #{tpu_custom_call.1} parent=1 // pred_check_branch
      %112 = sbr.rel (0) target = $region17
    $region16: #{tpu_custom_call.1} parent=1 // pred_region
      %113 = dma.done [#allocation3], 64
    $region17: #{tpu_custom_call.1} parent=1 // pred_fallthru
      _
    %114 = vsyncpa [#allocation3], 1

</llo_original>
